<compile_context>
chip_gen: v6e
topology: v6e:2x2x1
jax: 0.10.0
libtpu: 0.0.40
codegen_flags: <defaults>
</compile_context>

<pallas_src>
import functools

import jax
import jax.numpy as jnp
from jax.experimental import pallas as pl
from jax.experimental.pallas import tpu as pltpu


def _pick_group_tile(c_in):
    """Input groups per grid step.  Prefer 8-aligned tiles (<= 64 groups) that
    divide c_in so dynamic channel-slice offsets stay 8-aligned; otherwise a
    single tile covering all groups."""
    for d in (64, 32, 16, 8):
        if c_in % d == 0 and c_in > d:
            return d
    return c_in


# ----------------------------------------------------------------------------
# Pallas kernel: one grid step = G input groups -> C = G*q output channels.
# ----------------------------------------------------------------------------
def _s2conv_kernel(xp_ref, p_ref, o_ref, *, S, G, q, n, t, eps):
    # xp_ref : (Cp, N*T)  shifted + channel-padded input, VMEM-resident
    # p_ref  : (C, S+2)   packed per-output-channel params [w_0..w_{S-1}, gamma, beta]
    # o_ref  : (N, C, T)  output block, written directly in NCT layout
    C = G * q
    c0 = pl.program_id(0) * G
    if G % 8 == 0:
        c0 = pl.multiple_of(c0, 8)

    # Channel halo for this tile: groups [c0, c0+G) need input channels
    # [c0, c0 + G + S - 1).  One aligned dynamic slice of the resident input;
    # the S taps below are static sub-slices (no S x HBM duplication).
    hal = xp_ref[pl.ds(c0, G + S - 1), :]                    # (G+S-1, NT)
    if q > 1:
        # Interleaved sublane repeat so the q output channels of a group share
        # the same taps.  On-chip relayout only - no q x HBM duplication.
        hal = jnp.repeat(hal, q, axis=0)                     # ((G+S-1)*q, NT)

    p = p_ref[...]                                           # (C, S+2)

    # Grouped pointwise conv: unrolled accumulation over the S taps.
    acc = p[:, 0:1] * hal[0:C, :]
    for s in range(1, S):
        acc = acc + p[:, s:s + 1] * hal[s * q:s * q + C, :]

    # BatchNorm1d, training mode: per-channel stats over (N, T), biased variance.
    # Two-pass form kept for exact parity with the reference; `acc` stays on-chip.
    mean = jnp.mean(acc, axis=1, keepdims=True)              # (C, 1)
    var = jnp.mean(jnp.square(acc - mean), axis=1, keepdims=True)
    y = p[:, S:S + 1] * (acc - mean) * jax.lax.rsqrt(var + eps) + p[:, S + 1:S + 2]
    y = jnp.maximum(y, 0.0)                                  # ReLU, (C, NT)

    # One dense (C, T) slab store per batch element, straight into NCT layout.
    for nn in range(n):
        o_ref[nn] = y[:, nn * t:(nn + 1) * t]


# ----------------------------------------------------------------------------
# Wrapper: shift / pad glue (static slices only, no gathers) + pallas_call.
# ----------------------------------------------------------------------------
def s2conv_pallas(x, conv_w, gamma, beta, *, shift_size, q=1, dilation=1,
                  eps=1e-5):
    """x: (N, C_in, T) f32.  conv_w: (C_out, S) (kernel_size=1 squeezed)."""
    assert isinstance(q, int) and q >= 1, "only integer q >= 1 supported"
    n, c_in, t = x.shape
    S = shift_size
    C_out = c_in * q
    NT = n * t

    # --- per-channel temporal shift: S statically shifted pad/slice copies ---
    x_sh = jnp.zeros_like(x)
    for r in range(S):
        sh = (r - S // 2) * dilation
        if sh > 0:
            xr = jnp.pad(x, ((0, 0), (0, 0), (sh, 0)))[:, :, :t]
        elif sh < 0:
            xr = jnp.pad(x, ((0, 0), (0, 0), (0, -sh)))[:, :, -sh:]
        else:
            xr = x
        mask = (jnp.arange(c_in) % S) == r
        x_sh = jnp.where(mask[None, :, None], xr, x_sh)

    # --- channel-major, lane-dense (C, N*T) + zero channel padding -----------
    pad_top = S // 2
    pad_bot = pad_top - 1 if S % 2 == 0 else pad_top
    x_cm = jnp.transpose(x_sh, (1, 0, 2)).reshape(c_in, NT)
    xp = jnp.pad(x_cm, ((pad_top, pad_bot), (0, 0)))         # (Cp, NT), Cp=c_in+S-1
    cp = c_in + pad_top + pad_bot

    # --- packed per-output-channel params: [w_0..w_{S-1}, gamma, beta] -------
    p = jnp.concatenate(
        [conv_w.reshape(C_out, S),
         gamma.reshape(C_out, 1),
         beta.reshape(C_out, 1)], axis=1).astype(jnp.float32)  # (C_out, S+2)

    G = _pick_group_tile(c_in)          # groups per grid step
    num_tiles = c_in // G

    out = pl.pallas_call(
        functools.partial(_s2conv_kernel, S=S, G=G, q=q, n=n, t=t, eps=eps),
        out_shape=jax.ShapeDtypeStruct((n, C_out, t), x.dtype),
        grid=(num_tiles,),
        in_specs=[
            # resident (constant index_map -> single HBM read for the whole call)
            pl.BlockSpec((cp, NT), lambda i: (0, 0)),
            pl.BlockSpec((G * q, S + 2), lambda i: (i, 0)),
        ],
        out_specs=pl.BlockSpec((n, G * q, t), lambda i: (0, i, 0)),
        compiler_params=pltpu.CompilerParams(
            dimension_semantics=("parallel",),
            vmem_limit_bytes=48 * 1024 * 1024),
    )(xp, p)
    return out                                               # already (N, C_out, T)


# ----------------------------------------------------------------------------
# Pure-JAX reference replicating the PyTorch forward exactly
# ----------------------------------------------------------------------------
def s2conv_ref(x, conv_w, gamma, beta, *, shift_size, q=1, dilation=1,
               eps=1e-5):
    n, c_in, t = x.shape
    S = shift_size
    C_out = c_in * q
    out = jnp.zeros_like(x)
    for k in range(c_in):
        sh = (k % S - S // 2) * dilation
        if sh < 0:
            out = out.at[:, k, :sh].set(x[:, k, -sh:])
        elif sh > 0:
            out = out.at[:, k, sh:].set(x[:, k, :-sh])
        else:
            out = out.at[:, k, :].set(x[:, k, :])
    pad_top = S // 2
    pad_bot = pad_top - 1 if S % 2 == 0 else pad_top
    xp = jnp.concatenate(
        [jnp.zeros((n, pad_top, t)), out, jnp.zeros((n, pad_bot, t))], axis=1)
    stride = 1
    nw = (xp.shape[1] - S + 1) // stride
    h = jnp.concatenate([xp[:, i * stride:i * stride + S, :]
                         for i in range(nw)], axis=1)
    y = jnp.zeros((n, C_out, t))
    for co in range(C_out):
        g = co // q
        y = y.at[:, co, :].set(
            jnp.sum(conv_w[co, :, None] * h[:, g * S:(g + 1) * S, :], axis=1))
    mean = y.mean(axis=(0, 2), keepdims=True)
    var = ((y - mean) ** 2).mean(axis=(0, 2), keepdims=True)
    y_hat = (y - mean) / jnp.sqrt(var + eps)
    o = gamma[None, :, None] * y_hat + beta[None, :, None]
    return jnp.maximum(o, 0.0)


if __name__ == "__main__":
    def run_case(name, n, c_in, t, S, q, dil, key):
        kx, kw, kg, kb = jax.random.split(key, 4)
        C_out = c_in * q
        x = jax.random.normal(kx, (n, c_in, t), dtype=jnp.float32)
        conv_w = jax.random.normal(kw, (C_out, S), dtype=jnp.float32) * 0.5
        gamma = 1.0 + 0.1 * jax.random.normal(kg, (C_out,), dtype=jnp.float32)
        beta = 0.1 * jax.random.normal(kb, (C_out,), dtype=jnp.float32)

        fwd = jax.jit(functools.partial(
            s2conv_pallas, shift_size=S, q=q, dilation=dil))
        out = jax.block_until_ready(fwd(x, conv_w, gamma, beta))

        ref = s2conv_ref(x, conv_w, gamma, beta,
                         shift_size=S, q=q, dilation=dil)
        assert out.shape == (n, C_out, t), f"{name}: bad shape {out.shape}"
        assert jnp.allclose(out, ref, atol=1e-4, rtol=1e-4), f"{name}: mismatch"

    key = jax.random.PRNGKey(0)
    k1, k2 = jax.random.split(key)
    # tiny config matching the module defaults (single channel tile)
    run_case("tiny", n=2, c_in=4, t=16, S=3, q=1, dil=1, key=k1)
    # multi-tile grid, even shift_size, dilation>1, lane-dense T
    run_case("tiled", n=2, c_in=16, t=128, S=4, q=1, dil=2, key=k2)

    print("KERNEL_OK")
</pallas_src>

<mosaic_0001>
module attributes {stable_mosaic.version = 11 : i64} {
  func.func @_s2conv_kernel(%arg0: i32, %arg1: memref<6x32xf32, #tpu.memory_space<vmem>>, %arg2: memref<4x5xf32, #tpu.memory_space<vmem>>, %arg3: memref<2x4x16xf32, #tpu.memory_space<vmem>>) attributes {dimension_semantics = [#tpu.dimension_semantics<parallel>], iteration_bounds = array<i64: 1>, scalar_prefetch = 0 : i64, scratch_operands = 0 : i64, tpu.core_type = #tpu.core_type<tc>, window_params = [{pipeline_mode = #tpu.pipeline_mode<synchronous>, transform_indices = @transform_0, window_bounds = array<i64: 6, 32>}, {transform_indices = @transform_1, window_bounds = array<i64: 4, 5>}, {transform_indices = @transform_2, window_bounds = array<i64: 2, 4, 16>}]} {
    %c4_i32 = arith.constant 4 : i32
    %0 = arith.muli %arg0, %c4_i32 : i32
    %1 = arith.index_cast %0 : i32 to index
    %c0 = arith.constant 0 : index
    %2 = vector.load %arg1[%1, %c0] : memref<6x32xf32, #tpu.memory_space<vmem>>, vector<6x32xf32>
    %c0_0 = arith.constant 0 : index
    %c0_1 = arith.constant 0 : index
    %3 = vector.load %arg2[%c0_0, %c0_1] : memref<4x5xf32, #tpu.memory_space<vmem>>, vector<4x5xf32>
    %4 = vector.extract_strided_slice %3 {offsets = [0, 0], sizes = [4, 1], strides = [1, 1]} : vector<4x5xf32> to vector<4x1xf32>
    %5 = vector.extract_strided_slice %2 {offsets = [0, 0], sizes = [4, 32], strides = [1, 1]} : vector<6x32xf32> to vector<4x32xf32>
    %6 = vector.broadcast %4 : vector<4x1xf32> to vector<4x32xf32>
    %7 = arith.mulf %6, %5 : vector<4x32xf32>
    %8 = vector.extract_strided_slice %3 {offsets = [0, 1], sizes = [4, 1], strides = [1, 1]} : vector<4x5xf32> to vector<4x1xf32>
    %9 = vector.extract_strided_slice %2 {offsets = [1, 0], sizes = [4, 32], strides = [1, 1]} : vector<6x32xf32> to vector<4x32xf32>
    %10 = vector.broadcast %8 : vector<4x1xf32> to vector<4x32xf32>
    %11 = arith.mulf %10, %9 : vector<4x32xf32>
    %12 = arith.addf %7, %11 : vector<4x32xf32>
    %13 = vector.extract_strided_slice %3 {offsets = [0, 2], sizes = [4, 1], strides = [1, 1]} : vector<4x5xf32> to vector<4x1xf32>
    %14 = vector.extract_strided_slice %2 {offsets = [2, 0], sizes = [4, 32], strides = [1, 1]} : vector<6x32xf32> to vector<4x32xf32>
    %15 = vector.broadcast %13 : vector<4x1xf32> to vector<4x32xf32>
    %16 = arith.mulf %15, %14 : vector<4x32xf32>
    %17 = arith.addf %12, %16 : vector<4x32xf32>
    %cst = arith.constant dense<0.000000e+00> : vector<4xf32>
    %18 = vector.multi_reduction <add>, %17, %cst [1] : vector<4x32xf32> to vector<4xf32>
    %19 = vector.shape_cast %18 : vector<4xf32> to vector<4x1xf32>
    %cst_2 = arith.constant 3.200000e+01 : f32
    %20 = vector.broadcast %cst_2 : f32 to vector<4x1xf32>
    %21 = arith.divf %19, %20 : vector<4x1xf32>
    %22 = vector.broadcast %21 : vector<4x1xf32> to vector<4x32xf32>
    %23 = arith.subf %17, %22 : vector<4x32xf32>
    %24 = arith.mulf %23, %23 : vector<4x32xf32>
    %cst_3 = arith.constant dense<0.000000e+00> : vector<4xf32>
    %25 = vector.multi_reduction <add>, %24, %cst_3 [1] : vector<4x32xf32> to vector<4xf32>
    %26 = vector.shape_cast %25 : vector<4xf32> to vector<4x1xf32>
    %cst_4 = arith.constant 3.200000e+01 : f32
    %27 = vector.broadcast %cst_4 : f32 to vector<4x1xf32>
    %28 = arith.divf %26, %27 : vector<4x1xf32>
    %29 = vector.extract_strided_slice %3 {offsets = [0, 3], sizes = [4, 1], strides = [1, 1]} : vector<4x5xf32> to vector<4x1xf32>
    %30 = vector.broadcast %21 : vector<4x1xf32> to vector<4x32xf32>
    %31 = arith.subf %17, %30 : vector<4x32xf32>
    %32 = vector.broadcast %29 : vector<4x1xf32> to vector<4x32xf32>
    %33 = arith.mulf %32, %31 : vector<4x32xf32>
    %cst_5 = arith.constant 9.99999974E-6 : f32
    %34 = vector.broadcast %cst_5 : f32 to vector<4x1xf32>
    %35 = arith.addf %28, %34 : vector<4x1xf32>
    %36 = math.rsqrt %35 : vector<4x1xf32>
    %37 = vector.broadcast %36 : vector<4x1xf32> to vector<4x32xf32>
    %38 = arith.mulf %33, %37 : vector<4x32xf32>
    %39 = vector.extract_strided_slice %3 {offsets = [0, 4], sizes = [4, 1], strides = [1, 1]} : vector<4x5xf32> to vector<4x1xf32>
    %40 = vector.broadcast %39 : vector<4x1xf32> to vector<4x32xf32>
    %41 = arith.addf %38, %40 : vector<4x32xf32>
    %cst_6 = arith.constant 0.000000e+00 : f32
    %42 = vector.broadcast %cst_6 : f32 to vector<4x32xf32>
    %43 = arith.maximumf %41, %42 : vector<4x32xf32>
    %44 = vector.extract_strided_slice %43 {offsets = [0, 0], sizes = [4, 16], strides = [1, 1]} : vector<4x32xf32> to vector<4x16xf32>
    %c0_7 = arith.constant 0 : index
    %c0_8 = arith.constant 0 : index
    %c0_9 = arith.constant 0 : index
    %45 = vector.load %arg3[%c0_7, %c0_8, %c0_9] : memref<2x4x16xf32, #tpu.memory_space<vmem>>, vector<1x4x16xf32>
    %46 = vector.shape_cast %45 : vector<1x4x16xf32> to vector<4x16xf32>
    %47 = vector.shape_cast %44 : vector<4x16xf32> to vector<1x4x16xf32>
    tpu.vector_store %arg3[%c0_7, %c0_8, %c0_9], %47 {strides = array<i32>} : memref<2x4x16xf32, #tpu.memory_space<vmem>>, vector<1x4x16xf32>,
    %48 = vector.extract_strided_slice %43 {offsets = [0, 16], sizes = [4, 16], strides = [1, 1]} : vector<4x32xf32> to vector<4x16xf32>
    %c1 = arith.constant 1 : index
    %c0_10 = arith.constant 0 : index
    %c0_11 = arith.constant 0 : index
    %49 = vector.load %arg3[%c1, %c0_10, %c0_11] : memref<2x4x16xf32, #tpu.memory_space<vmem>>, vector<1x4x16xf32>
    %50 = vector.shape_cast %49 : vector<1x4x16xf32> to vector<4x16xf32>
    %51 = vector.shape_cast %48 : vector<4x16xf32> to vector<1x4x16xf32>
    tpu.vector_store %arg3[%c1, %c0_10, %c0_11], %51 {strides = array<i32>} : memref<2x4x16xf32, #tpu.memory_space<vmem>>, vector<1x4x16xf32>,
    return
  }
  func.func @transform_0(%arg0: i32) -> (i32, i32) {
    %c0_i32 = arith.constant 0 : i32
    %c0_i32_0 = arith.constant 0 : i32
    %c0_i32_1 = arith.constant 0 : i32
    return %c0_i32, %c0_i32_0 : i32, i32
  }
  func.func @transform_1(%arg0: i32) -> (i32, i32) {
    %c0_i32 = arith.constant 0 : i32
    %c0_i32_0 = arith.constant 0 : i32
    return %arg0, %c0_i32 : i32, i32
  }
  func.func @transform_2(%arg0: i32) -> (i32, i32, i32) {
    %c0_i32 = arith.constant 0 : i32
    %c0_i32_0 = arith.constant 0 : i32
    %c0_i32_1 = arith.constant 0 : i32
    return %c0_i32, %arg0, %c0_i32_0 : i32, i32, i32
  }
}

</mosaic_0001>

<llo_original>
// kernel: s2conv_pallas.1
$region0: #{s2conv_pallas.1}
  #allocation0 [shape = 'u32[]', space=smem, size = 0x4, offset = 0x4, fixed_abs, tag = 'smem constant byte address 0x4 - core index']
  #allocation1 [shape = 'u32[144,128]{1,0:T(1,128)}', space=vmem, size = 0x12000, scoped, tag = 'internal scratch']
  %s0 = inlined_call_operand.vmem [shape: f32[6,32], index: 0, kind: input, shape index: {}]
  %s1 = inlined_call_operand.vmem [shape: f32[4,5], index: 1, kind: input, shape index: {}]
  %s2 = inlined_call_operand.hbm [shape: f32[2,4,16], index: 2, kind: output, shape index: {}]
  %s3 = sld [smem:[#allocation0]]
  $region18: #{s2conv_pallas.1} parent=0
    _
  %s5 = ssub.s32 1, %s3
  %s6 = scalar_select 0, %s5, %s3
  $region1: #{s2conv_pallas.1} parent=0
    #allocation2 [shape = 'u8[4096]{0}', space=vmem, size = 0x1000, scoped, tag = 'output window, operand 0, single buffered']
    #allocation3 [shape = 's32[1]{0}', space=sflag, size = 0x4, scoped, tag = 'scoped memory for s2conv_pallas.1']
    %7 = vsyncpa [#allocation3], 0
    // Predicated region
    $region2: #{s2conv_pallas.1} parent=1 // pred_check
      _
    $region3: #{s2conv_pallas.1} parent=1 // pred_check_branch
      %9 = sbr.rel (0) target = $region5
    $region4: #{s2conv_pallas.1} parent=1 // pred_region
      _
    $region5: #{s2conv_pallas.1} parent=1 // pred_fallthru
      _
    // Predicated region
    $region6: #{s2conv_pallas.1} parent=1 // pred_check
      _
    $region7: #{s2conv_pallas.1} parent=1 // pred_check_branch
      %11 = sbr.rel (0) target = $region9
    $region8: #{s2conv_pallas.1} parent=1 // pred_region
      _
    $region9: #{s2conv_pallas.1} parent=1 // pred_fallthru
      _
    %s12 = smul.u32 0, 4
    %s13 = scalar_lea.vmem %s0, %s12
    %v14 = vld [vmem:[%s13] sm:$0x3f]
    %v15 = vld [vmem:[%s1] sm:$0xf]
    %17 = vset.pattern.permute.xlu0 0
    %18 = vperm.xlu0 %17, %v15
    %v19 = vpop.permute.xlu0 %18
    %v21 = vmul.f32 %v19, %v14
    %22 = vset.pattern.permute.xlu0 1
    %23 = vperm.xlu0 %22, %v15
    %v24 = vpop.permute.xlu0 %23
    %v27 = vrot.slane %v14, 1
    %v29 = vmul.f32 %v24, %v27
    %v30 = vadd.f32 %v21, %v29
    %31 = vset.pattern.permute.xlu0 2
    %32 = vperm.xlu0 %31, %v15
    %v33 = vpop.permute.xlu0 %32
    %v35 = vrot.slane %v14, 2
    %v37 = vmul.f32 %v33, %v35
    %v38 = vadd.f32 %v30, %v37
    %vm39 = vcmask 257024
    %v40 = vsel %vm39, %v38, 0.0
    %41 = vadd.xlane.f32.xlu0 %v40
    %v42 = vpop.xlane.xlu0 %41
    %v43 = vrcp.pop 32.0
    %v44 = vmul.f32 %v42, %v43
    %v45 = vsub.f32 %v38, %v44
    %v46 = vmul.f32 %v45, %v45
    %v47 = vsel %vm39, %v46, 0.0
    %48 = vadd.xlane.f32.xlu0 %v47
    %v49 = vpop.xlane.xlu0 %48
    %v50 = vmul.f32 %v49, %v43
    %51 = vset.pattern.permute.xlu0 3
    %52 = vperm.xlu0 %51, %v15
    %v53 = vpop.permute.xlu0 %52
    %v55 = vmul.f32 %v53, %v45
    %v56 = vadd.f32 %v50, 1e-05
    %v57 = vrsqrt.pop %v56
    %v58 = vmul.f32 %v55, %v57
    %59 = vset.pattern.permute.xlu0 4
    %60 = vperm.xlu0 %59, %v15
    %v61 = vpop.permute.xlu0 %60
    %v63 = vadd.f32 %v58, %v61
    %v64 = vmax.f32 %v63, 0.0
    %vm65 = vcmask 125952
    %66 = vst.msk [vmem:[#allocation2] sm:$0xf] %vm65, %v64
    %68 = vrot.lane.b32.xlu0 %v64, 112
    %v69 = vpop.permute.xlu0 %68
    %s71 = scalar_lea.vmem [#allocation2], 4
    %72 = vst.msk [vmem:[%s71] sm:$0xf] %vm65, %v69
    // Predicated region
    $region10: #{s2conv_pallas.1} parent=1 // pred_check
      _
    $region11: #{s2conv_pallas.1} parent=1 // pred_check_branch
      %74 = sbr.rel (0) target = $region13
    $region12: #{s2conv_pallas.1} parent=1 // pred_region
      %s76 = ssub.s32 128, 128
      %77 = vsyncadd [#allocation3], %s76
      %s78 = sshll.u32 [#allocation2], 4
      %s79 = int_to_ptr.vmem [resolvable:$true] %s78
      %84 = dma.vmem_to_hbm [thread:$0]  %s79, 128, %s2, [#allocation3], 64, 64, 4
    $region13: #{s2conv_pallas.1} parent=1 // pred_fallthru
      _
    // Predicated region
    $region14: #{s2conv_pallas.1} parent=1 // pred_check
      _
    $region15: #{s2conv_pallas.1} parent=1 // pred_check_branch
      %86 = sbr.rel (0) target = $region17
    $region16: #{s2conv_pallas.1} parent=1 // pred_region
      %87 = dma.done [#allocation3], 128
    $region17: #{s2conv_pallas.1} parent=1 // pred_fallthru
      _
    %88 = vsyncpa [#allocation3], 1

</llo_original>
